<compile_context>
chip_gen: v7x
topology: tpu7x:2x2x1
jax: 0.10.0
libtpu: 0.0.40
codegen_flags: <defaults>
</compile_context>

<pallas_src>
import jax
import jax.numpy as jnp
from jax.experimental import pallas as pl
from jax.experimental.pallas import tpu as pltpu


def _linear_kernel(x_ref, wb_ref, o_ref):
    # x_ref:  (IN, TILE_B) VMEM, lane-dense along batch.
    # wb_ref: (OUT*IN + OUT,) SMEM scalars: [w(0,0)..w(OUT-1,IN-1), b0..b(OUT-1)].
    # o_ref:  (OUT, TILE_B) VMEM, lane-dense along batch.
    in_features = x_ref.shape[0]
    out_features = o_ref.shape[0]
    x = x_ref[...]  # single full-tile load; IN rows fit in one sublane tile
    for o in range(out_features):            # OUT = 1: unrolled at trace time
        acc = x[0:1, :] * wb_ref[o * in_features + 0]
        for i in range(1, in_features):       # IN = 3: 2 more VPU FMAs
            acc = acc + x[i:i + 1, :] * wb_ref[o * in_features + i]
        o_ref[o:o + 1, :] = acc + wb_ref[out_features * in_features + o]


def linear_forward(x, weight, bias, *, tile_b=512):
    """x: (B, IN) f32, weight: (OUT, IN) f32, bias: (OUT,) f32 -> (B, OUT) f32."""
    B, IN = x.shape
    OUT, IN2 = weight.shape
    assert IN2 == IN and bias.shape == (OUT,)

    # Fold weight + bias into one tiny 1-D SMEM array (minimal SMEM padding).
    wb = jnp.concatenate(
        [weight.reshape(-1), bias.reshape(-1)]).astype(jnp.float32)

    # Lane-dense layout plumbing: batch -> lane axis, padded to multiple of 128.
    LANE = 128
    tb = max(LANE, min(int(tile_b), pl.cdiv(B, LANE) * LANE))
    Bp = pl.cdiv(B, tb) * tb
    x_t = x.T  # (IN, B)
    if Bp != B:
        x_t = jnp.pad(x_t, ((0, 0), (0, Bp - B)))

    grid = (Bp // tb,)
    itemsize = jnp.dtype(x.dtype).itemsize
    cost = pl.CostEstimate(
        flops=2 * B * IN * OUT,
        transcendentals=0,
        bytes_accessed=(IN * Bp + OUT * Bp) * itemsize + (OUT * IN + OUT) * 4,
    )

    y_t = pl.pallas_call(
        _linear_kernel,
        out_shape=jax.ShapeDtypeStruct((OUT, Bp), x.dtype),
        grid=grid,
        in_specs=[
            pl.BlockSpec((IN, tb), lambda i: (0, i)),                 # x^T tile
            pl.BlockSpec(memory_space=pltpu.MemorySpace.SMEM),        # [w, b]
        ],
        out_specs=pl.BlockSpec((OUT, tb), lambda i: (0, i)),
        compiler_params=pltpu.CompilerParams(
            dimension_semantics=("parallel",)),
        cost_estimate=cost,
    )(x_t, wb)

    # Back to PyTorch layout (B, OUT); drop batch padding if any.
    return y_t[:, :B].T


if __name__ == "__main__":
    input_size = 3
    output_size = 1

    key = jax.random.PRNGKey(0)
    kx, kw, kb, kx2 = jax.random.split(key, 4)

    # nn.Linear-style init: U(-1/sqrt(in), 1/sqrt(in))
    bound = 1.0 / float(input_size) ** 0.5
    weight = jax.random.uniform(kw, (output_size, input_size),
                                minval=-bound, maxval=bound, dtype=jnp.float32)
    bias = jax.random.uniform(kb, (output_size,),
                              minval=-bound, maxval=bound, dtype=jnp.float32)

    # Small batch (single 128-lane padded tile).
    x_small = jax.random.normal(kx, (8, input_size), dtype=jnp.float32)
    out_small = linear_forward(x_small, weight, bias)
    jax.block_until_ready(out_small)
    ref_small = x_small @ weight.T + bias
    assert out_small.shape == (8, output_size)
    assert jnp.allclose(out_small, ref_small, atol=1e-5, rtol=1e-5)

    # Larger batch (tiled, padded, lane-dense 128-wide tiles, parallel grid).
    x_big = jax.random.normal(kx2, (300, input_size), dtype=jnp.float32)
    out_big = linear_forward(x_big, weight, bias, tile_b=128)
    jax.block_until_ready(out_big)
    ref_big = x_big @ weight.T + bias
    assert out_big.shape == (300, output_size)
    assert jnp.allclose(out_big, ref_big, atol=1e-5, rtol=1e-5)

    print("KERNEL_OK")
</pallas_src>

<mosaic_0001>
module attributes {stable_mosaic.version = 11 : i64} {
  func.func @_linear_kernel(%arg0: i32, %arg1: memref<3x128xf32, #tpu.memory_space<vmem>>, %arg2: memref<4xf32, #tpu.memory_space<smem>>, %arg3: memref<1x128xf32, #tpu.memory_space<vmem>>) attributes {dimension_semantics = [#tpu.dimension_semantics<parallel>], iteration_bounds = array<i64: 1>, scalar_prefetch = 0 : i64, scratch_operands = 0 : i64, tpu.core_type = #tpu.core_type<tc>, window_params = [{transform_indices = @transform_0, window_bounds = array<i64: 3, 128>}, {transform_indices = @transform_1, window_bounds = array<i64: 4>}, {transform_indices = @transform_2, window_bounds = array<i64: 1, 128>}]} {
    %c0 = arith.constant 0 : index
    %c0_0 = arith.constant 0 : index
    %0 = vector.load %arg1[%c0, %c0_0] : memref<3x128xf32, #tpu.memory_space<vmem>>, vector<3x128xf32>
    %1 = vector.extract_strided_slice %0 {offsets = [0, 0], sizes = [1, 128], strides = [1, 1]} : vector<3x128xf32> to vector<1x128xf32>
    %c0_1 = arith.constant 0 : index
    %2 = memref.load %arg2[%c0_1] : memref<4xf32, #tpu.memory_space<smem>>
    %3 = vector.broadcast %2 : f32 to vector<1x128xf32>
    %4 = arith.mulf %1, %3 : vector<1x128xf32>
    %5 = vector.extract_strided_slice %0 {offsets = [1, 0], sizes = [1, 128], strides = [1, 1]} : vector<3x128xf32> to vector<1x128xf32>
    %c1 = arith.constant 1 : index
    %6 = memref.load %arg2[%c1] : memref<4xf32, #tpu.memory_space<smem>>
    %7 = vector.broadcast %6 : f32 to vector<1x128xf32>
    %8 = arith.mulf %5, %7 : vector<1x128xf32>
    %9 = arith.addf %4, %8 : vector<1x128xf32>
    %10 = vector.extract_strided_slice %0 {offsets = [2, 0], sizes = [1, 128], strides = [1, 1]} : vector<3x128xf32> to vector<1x128xf32>
    %c2 = arith.constant 2 : index
    %11 = memref.load %arg2[%c2] : memref<4xf32, #tpu.memory_space<smem>>
    %12 = vector.broadcast %11 : f32 to vector<1x128xf32>
    %13 = arith.mulf %10, %12 : vector<1x128xf32>
    %14 = arith.addf %9, %13 : vector<1x128xf32>
    %c3 = arith.constant 3 : index
    %15 = memref.load %arg2[%c3] : memref<4xf32, #tpu.memory_space<smem>>
    %16 = vector.broadcast %15 : f32 to vector<1x128xf32>
    %17 = arith.addf %14, %16 : vector<1x128xf32>
    %c0_2 = arith.constant 0 : index
    %c0_3 = arith.constant 0 : index
    %18 = vector.load %arg3[%c0_2, %c0_3] : memref<1x128xf32, #tpu.memory_space<vmem>>, vector<1x128xf32>
    tpu.vector_store %arg3[%c0_2, %c0_3], %17 {strides = array<i32>} : memref<1x128xf32, #tpu.memory_space<vmem>>, vector<1x128xf32>,
    return
  }
  func.func @transform_0(%arg0: i32) -> (i32, i32) {
    %c0_i32 = arith.constant 0 : i32
    %c0_i32_0 = arith.constant 0 : i32
    return %c0_i32, %arg0 : i32, i32
  }
  func.func @transform_1(%arg0: i32) -> i32 {
    %c0_i32 = arith.constant 0 : i32
    %c0_i32_0 = arith.constant 0 : i32
    return %c0_i32 : i32
  }
  func.func @transform_2(%arg0: i32) -> (i32, i32) {
    %c0_i32 = arith.constant 0 : i32
    %c0_i32_0 = arith.constant 0 : i32
    return %c0_i32, %arg0 : i32, i32
  }
}

</mosaic_0001>

<llo_original>
// kernel: tpu_custom_call.1
$region0: #{tpu_custom_call.1}
  #allocation0 [shape = 'u32[]', space=smem, size = 0x4, offset = 0x4, fixed_abs, tag = 'smem constant byte address 0x4 - core index']
  #allocation1 [shape = 'u32[144,128]{1,0:T(1,128)}', space=vmem, size = 0x12000, scoped, tag = 'internal scratch']
  %s0 = inlined_call_operand.hbm [shape: f32[3,128], index: 0, kind: input, shape index: {}]
  %s1 = inlined_call_operand.vmem [shape: f32[4], index: 1, kind: input, shape index: {}]
  %s2 = inlined_call_operand.hbm [shape: f32[1,128], index: 2, kind: output, shape index: {}]
  %s3 = sld [smem:[#allocation0]]
  $region26: #{tpu_custom_call.1} parent=0
    _
  %s5 = ssub.s32 1, %s3
  %s6 = scalar_select 0, %s5, %s3
  $region1: #{tpu_custom_call.1} parent=0
    #allocation2 [shape = 'u8[2048]{0}', space=vmem, size = 0x800, scoped, tag = 'input window, operand 0, single buffered']
    #allocation3 [shape = 's32[1]{0}', space=sflag, size = 0x4, scoped, tag = 'scoped memory for tpu_custom_call.1']
    #allocation4 [shape = 's32[1]{0}', space=sflag, size = 0x4, scoped, tag = 'scoped memory for tpu_custom_call.1']
    #allocation5 [shape = 's32[1]{0}', space=sflag, size = 0x4, scoped, tag = 'scoped memory for tpu_custom_call.1']
    #allocation6 [shape = 'u8[512]{0}', space=smem, size = 0x200, scoped, tag = 'input window, operand 1, single buffered']
    #allocation7 [shape = 'u8[512]{0}', space=vmem, size = 0x400, scoped, tag = 'output window, operand 0, single buffered']
    %7 = vsyncpa [#allocation3], 0
    %8 = vsyncpa [#allocation5], 0
    %9 = vsyncpa [#allocation4], 0
    // Predicated region
    $region2: #{tpu_custom_call.1} parent=1 // pred_check
      _
    $region3: #{tpu_custom_call.1} parent=1 // pred_check_branch
      %11 = sbr.rel (0) target = $region5
    $region4: #{tpu_custom_call.1} parent=1 // pred_region
      %s13 = ssub.s32 64, 64
      %14 = vsyncadd [#allocation3], %s13
      %s16 = sshll.u32 [#allocation2], 4
      %s17 = int_to_ptr.vmem [resolvable:$true] %s16
      %19 = dma.hbm_to_vmem [thread:$0]  %s0, 64, %s17, [#allocation3]
    $region5: #{tpu_custom_call.1} parent=1 // pred_fallthru
      _
    // Predicated region
    $region6: #{tpu_custom_call.1} parent=1 // pred_check
      _
    $region7: #{tpu_custom_call.1} parent=1 // pred_check_branch
      %21 = sbr.rel (0) target = $region9
    $region8: #{tpu_custom_call.1} parent=1 // pred_region
      %s23 = ssub.s32 16, 16
      %24 = vsyncadd [#allocation5], %s23
      %s26 = sshll.u32 %s1, 4
      %s27 = int_to_ptr.vmem [resolvable:$true] %s26
      %29 = dma.vmem_to_smem %s27, 16, [#allocation6], [#allocation5]
    $region9: #{tpu_custom_call.1} parent=1 // pred_fallthru
      _
    // Predicated region
    $region10: #{tpu_custom_call.1} parent=1 // pred_check
      _
    $region11: #{tpu_custom_call.1} parent=1 // pred_check_branch
      %31 = sbr.rel (0) target = $region13
    $region12: #{tpu_custom_call.1} parent=1 // pred_region
      %32 = dma.done [#allocation3], 64
    $region13: #{tpu_custom_call.1} parent=1 // pred_fallthru
      _
    // Predicated region
    $region14: #{tpu_custom_call.1} parent=1 // pred_check
      _
    $region15: #{tpu_custom_call.1} parent=1 // pred_check_branch
      %34 = sbr.rel (0) target = $region17
    $region16: #{tpu_custom_call.1} parent=1 // pred_region
      %35 = dma.done [#allocation5], 16
    $region17: #{tpu_custom_call.1} parent=1 // pred_fallthru
      _
    %36 = sfence
    %v37 = vld [vmem:[#allocation2] sm:$0x7]
    %s38 = sld [smem:[#allocation6]]
    %v39 = vstv %s38
    %v40 = vmul.f32 %v37, %v39
    %s41 = sld [smem:[#allocation6 + $0x1]]
    %v42 = vstv %s41
    %v43 = vmul.f32 %v37, %v42
    %v45 = vrot.slane %v43, 1
    %v47 = vadd.f32 %v40, %v45
    %s48 = sld [smem:[#allocation6 + $0x2]]
    %v49 = vstv %s48
    %v50 = vmul.f32 %v37, %v49
    %v52 = vrot.slane %v50, 2
    %v54 = vadd.f32 %v47, %v52
    %s55 = sld [smem:[#allocation6 + $0x3]]
    %v56 = vstv %s55
    %v57 = vadd.f32 %v54, %v56
    %58 = vst [vmem:[#allocation7] sm:$0x1] %v57
    // Predicated region
    $region18: #{tpu_custom_call.1} parent=1 // pred_check
      _
    $region19: #{tpu_custom_call.1} parent=1 // pred_check_branch
      %60 = sbr.rel (0) target = $region21
    $region20: #{tpu_custom_call.1} parent=1 // pred_region
      %s62 = ssub.s32 16, 16
      %63 = vsyncadd [#allocation4], %s62
      %s65 = sshll.u32 [#allocation7], 4
      %s66 = int_to_ptr.vmem [resolvable:$true] %s65
      %68 = dma.vmem_to_hbm [thread:$0]  %s66, 16, %s2, [#allocation4]
    $region21: #{tpu_custom_call.1} parent=1 // pred_fallthru
      _
    // Predicated region
    $region22: #{tpu_custom_call.1} parent=1 // pred_check
      _
    $region23: #{tpu_custom_call.1} parent=1 // pred_check_branch
      %70 = sbr.rel (0) target = $region25
    $region24: #{tpu_custom_call.1} parent=1 // pred_region
      %71 = dma.done [#allocation4], 16
    $region25: #{tpu_custom_call.1} parent=1 // pred_fallthru
      _
    %72 = vsyncpa [#allocation3], 1
    %73 = vsyncpa [#allocation4], 1
    %74 = vsyncpa [#allocation5], 1

</llo_original>
